<compile_context>
chip_gen: v7x
topology: tpu7x:2x2x1
jax: 0.10.0
libtpu: 0.0.40
codegen_flags: <defaults>
</compile_context>

<pallas_src>
import functools

import jax
import jax.numpy as jnp
from jax.experimental import pallas as pl
from jax.experimental.pallas import tpu as pltpu


# --------------------------------------------------------------------------
# Pallas kernel: weight_norm + conv-as-matmul + bias + ReLU, fully fused
# --------------------------------------------------------------------------

def _wn_conv_relu_kernel(p_ref, v_ref, g_ref, b_ref, o_ref):
    # p_ref: (K, tm)   im2col patches, output pixels on the lane axis
    # v_ref: (tn, K)   un-normalized weight rows (one row per out-channel)
    # g_ref, b_ref: (tn, 1)
    v = v_ref[...]
    # weight_norm with dim=0: per-output-channel L2 norm over (Cin, kH, kW)
    inv_norm = jax.lax.rsqrt(jnp.sum(v * v, axis=1, keepdims=True))   # (tn, 1)
    w = v * (g_ref[...] * inv_norm)                                   # (tn, K)
    acc = jnp.dot(w, p_ref[...], preferred_element_type=jnp.float32)  # (tn, tm)
    o_ref[...] = jnp.maximum(acc + b_ref[...], 0.0)                   # ReLU


# --------------------------------------------------------------------------
# Wrapper
# --------------------------------------------------------------------------

def _round_up(x, m):
    return ((x + m - 1) // m) * m


def wn_conv2d_relu(x, v, g, b, *, stride, padding, tm_max=2048, tn_max=512):
    """act(weight_norm(Conv2d)(x)) with circular padding.

    x: (B, Cin, H, W) float32 (PyTorch NCHW layout)
    v: (Cout, Cin, kH, kW) weight_v (PyTorch layout)
    g: (Cout,) weight_g
    b: (Cout,) bias
    returns: (B, Cout, OH, OW)
    """
    B, Cin, H, W = x.shape
    Cout, _, kH, kW = v.shape
    s, p = stride, padding

    # ---- host-side layout plumbing (no FLOPs) ----
    if p:
        # circular (wrap) padding on H and W, like padding_mode='circular'
        x = jnp.concatenate([x[:, :, -p:, :], x, x[:, :, :p, :]], axis=2)
        x = jnp.concatenate([x[..., -p:], x, x[..., :p]], axis=3)
    Hp, Wp = H + 2 * p, W + 2 * p
    OH = (Hp - kH) // s + 1
    OW = (Wp - kW) // s + 1

    # im2col: one strided slice per kernel tap; K ordered (ci, kh, kw) so the
    # PyTorch weight reshape lines up directly.
    taps = []
    for kh in range(kH):
        for kw in range(kW):
            taps.append(x[:, :, kh:kh + (OH - 1) * s + 1:s,
                          kw:kw + (OW - 1) * s + 1:s])                # (B,Cin,OH,OW)
    patches = jnp.stack(taps, axis=2)                                 # (B,Cin,kHkW,OH,OW)
    K = Cin * kH * kW
    M = B * OH * OW
    # -> (Cin, kHkW, B, OH, OW) -> (K, M): output pixels land on the lane axis
    patches = jnp.transpose(patches, (1, 2, 0, 3, 4)).reshape(K, M)

    # weight as (Cout, K), same (ci, kh, kw) ordering; g/b as (Cout, 1)
    v2d = v.reshape(Cout, K)
    g2 = g.reshape(Cout, 1)
    b2 = b.reshape(Cout, 1)

    # ---- tiling: Cout on sublanes, M (= B*OH*OW) on lanes ----
    Coutp = _round_up(Cout, 8)
    if Coutp != Cout:
        v2d = jnp.pad(v2d, ((0, Coutp - Cout), (0, 0)))
        g2 = jnp.pad(g2, ((0, Coutp - Cout), (0, 0)))
        b2 = jnp.pad(b2, ((0, Coutp - Cout), (0, 0)))
    tn = Coutp if (Coutp <= tn_max or Coutp % tn_max) else tn_max

    tm = min(tm_max, _round_up(M, 128))
    Mp = _round_up(M, tm)
    if Mp != M:
        patches = jnp.pad(patches, ((0, 0), (0, Mp - M)))
    grid = (Mp // tm, Coutp // tn)

    out = pl.pallas_call(
        _wn_conv_relu_kernel,
        grid=grid,
        in_specs=[
            pl.BlockSpec((K, tm), lambda i, j: (0, i)),
            pl.BlockSpec((tn, K), lambda i, j: (j, 0)),
            pl.BlockSpec((tn, 1), lambda i, j: (j, 0)),
            pl.BlockSpec((tn, 1), lambda i, j: (j, 0)),
        ],
        out_specs=pl.BlockSpec((tn, tm), lambda i, j: (j, i)),
        out_shape=jax.ShapeDtypeStruct((Coutp, Mp), jnp.float32),
        compiler_params=pltpu.CompilerParams(
            dimension_semantics=("parallel", "parallel"),
            vmem_limit_bytes=32 * 1024 * 1024,
        ),
    )(patches, v2d, g2, b2)

    out = out[:Cout, :M].reshape(Cout, B, OH, OW)
    return jnp.transpose(out, (1, 0, 2, 3))                          # NCHW


# --------------------------------------------------------------------------
# Main
# --------------------------------------------------------------------------

if __name__ == "__main__":
    # small shapes consistent with the module's forward
    B, Cin, H, W = 2, 4, 16, 16          # batch, input_channels, spatial
    Cout = 32                            # hidden_channels
    kH = kW = 4                          # input_kernel_size
    stride, padding = 2, 1               # input_stride, input_padding

    key = jax.random.PRNGKey(0)
    kx, kv, kg = jax.random.split(key, 3)
    x = jax.random.normal(kx, (B, Cin, H, W), jnp.float32)
    v = jax.random.normal(kv, (Cout, Cin, kH, kW), jnp.float32) * 0.1
    # weight_norm init sets g = ||v|| per out-channel; perturb so the
    # g * v / ||v|| path is genuinely exercised.
    v_norm = jnp.sqrt(jnp.sum(v * v, axis=(1, 2, 3)))
    g = v_norm * (1.0 + 0.1 * jax.random.normal(kg, (Cout,), jnp.float32))
    b = jnp.zeros((Cout,), jnp.float32)  # nn.init.zeros_(self.conv.bias)

    fwd = jax.jit(functools.partial(wn_conv2d_relu, stride=stride, padding=padding))
    out = jax.block_until_ready(fwd(x, v, g, b))

    OH = (H + 2 * padding - kH) // stride + 1
    OW = (W + 2 * padding - kW) // stride + 1
    assert out.shape == (B, Cout, OH, OW)
    assert bool(jnp.all(jnp.isfinite(out)))

    # reference: pure-JAX weight-normalized circular conv + ReLU (NCHW)
    w_eff = v * (g / v_norm)[:, None, None, None]
    xr = jnp.concatenate([x[:, :, -padding:, :], x, x[:, :, :padding, :]], axis=2)
    xr = jnp.concatenate([xr[..., -padding:], xr, xr[..., :padding]], axis=3)
    ref = jax.lax.conv_general_dilated(
        xr, w_eff, window_strides=(stride, stride), padding="VALID",
        dimension_numbers=("NCHW", "OIHW", "NCHW"),
        precision=jax.lax.Precision.HIGHEST)
    ref = jnp.maximum(ref + b.reshape(1, Cout, 1, 1), 0.0)
    assert bool(jnp.allclose(out, ref, rtol=2e-2, atol=5e-2)), \
        float(jnp.max(jnp.abs(out - ref)))

    print("KERNEL_OK")
</pallas_src>

<mosaic_0001>
module attributes {stable_mosaic.version = 11 : i64} {
  func.func @_wn_conv_relu_kernel(%arg0: i32, %arg1: i32, %arg2: memref<64x128xf32, #tpu.memory_space<vmem>>, %arg3: memref<32x64xf32, #tpu.memory_space<vmem>>, %arg4: memref<32x1xf32, #tpu.memory_space<vmem>>, %arg5: memref<32x1xf32, #tpu.memory_space<vmem>>, %arg6: memref<32x128xf32, #tpu.memory_space<vmem>>) attributes {dimension_semantics = [#tpu.dimension_semantics<parallel>, #tpu.dimension_semantics<parallel>], iteration_bounds = array<i64: 1, 1>, scalar_prefetch = 0 : i64, scratch_operands = 0 : i64, tpu.core_type = #tpu.core_type<tc>, window_params = [{transform_indices = @transform_0, window_bounds = array<i64: 64, 128>}, {transform_indices = @transform_1, window_bounds = array<i64: 32, 64>}, {transform_indices = @transform_2, window_bounds = array<i64: 32, 1>}, {transform_indices = @transform_3, window_bounds = array<i64: 32, 1>}, {transform_indices = @transform_4, window_bounds = array<i64: 32, 128>}]} {
    %c0 = arith.constant 0 : index
    %c0_0 = arith.constant 0 : index
    %0 = vector.load %arg3[%c0, %c0_0] : memref<32x64xf32, #tpu.memory_space<vmem>>, vector<32x64xf32>
    %1 = arith.mulf %0, %0 : vector<32x64xf32>
    %cst = arith.constant dense<0.000000e+00> : vector<32xf32>
    %2 = vector.multi_reduction <add>, %1, %cst [1] : vector<32x64xf32> to vector<32xf32>
    %3 = vector.shape_cast %2 : vector<32xf32> to vector<32x1xf32>
    %4 = math.rsqrt %3 : vector<32x1xf32>
    %c0_1 = arith.constant 0 : index
    %c0_2 = arith.constant 0 : index
    %5 = vector.load %arg4[%c0_1, %c0_2] : memref<32x1xf32, #tpu.memory_space<vmem>>, vector<32x1xf32>
    %6 = arith.mulf %5, %4 : vector<32x1xf32>
    %7 = vector.broadcast %6 : vector<32x1xf32> to vector<32x64xf32>
    %8 = arith.mulf %0, %7 : vector<32x64xf32>
    %c0_3 = arith.constant 0 : index
    %c0_4 = arith.constant 0 : index
    %9 = vector.load %arg2[%c0_3, %c0_4] : memref<64x128xf32, #tpu.memory_space<vmem>>, vector<64x128xf32>
    %cst_5 = arith.constant dense<0.000000e+00> : vector<32x128xf32>
    %10 = tpu.matmul %8, %9, %cst_5 {dimension_numbers = #tpu.dot_dimension_numbers<[1], [0], [0], [1], [0, 0, 1, 1], [], []>} : vector<32x64xf32>, vector<64x128xf32>, vector<32x128xf32> -> vector<32x128xf32>
    %c0_6 = arith.constant 0 : index
    %c0_7 = arith.constant 0 : index
    %11 = vector.load %arg5[%c0_6, %c0_7] : memref<32x1xf32, #tpu.memory_space<vmem>>, vector<32x1xf32>
    %12 = vector.broadcast %11 : vector<32x1xf32> to vector<32x128xf32>
    %13 = arith.addf %10, %12 : vector<32x128xf32>
    %cst_8 = arith.constant 0.000000e+00 : f32
    %14 = vector.broadcast %cst_8 : f32 to vector<32x128xf32>
    %15 = arith.maximumf %13, %14 : vector<32x128xf32>
    %c0_9 = arith.constant 0 : index
    %c0_10 = arith.constant 0 : index
    %16 = vector.load %arg6[%c0_9, %c0_10] : memref<32x128xf32, #tpu.memory_space<vmem>>, vector<32x128xf32>
    tpu.vector_store %arg6[%c0_9, %c0_10], %15 {strides = array<i32>} : memref<32x128xf32, #tpu.memory_space<vmem>>, vector<32x128xf32>,
    return
  }
  func.func @transform_0(%arg0: i32, %arg1: i32) -> (i32, i32) {
    %c0_i32 = arith.constant 0 : i32
    %c0_i32_0 = arith.constant 0 : i32
    return %c0_i32, %arg0 : i32, i32
  }
  func.func @transform_1(%arg0: i32, %arg1: i32) -> (i32, i32) {
    %c0_i32 = arith.constant 0 : i32
    %c0_i32_0 = arith.constant 0 : i32
    return %arg1, %c0_i32 : i32, i32
  }
  func.func @transform_2(%arg0: i32, %arg1: i32) -> (i32, i32) {
    %c0_i32 = arith.constant 0 : i32
    %c0_i32_0 = arith.constant 0 : i32
    return %arg1, %c0_i32 : i32, i32
  }
  func.func @transform_3(%arg0: i32, %arg1: i32) -> (i32, i32) {
    %c0_i32 = arith.constant 0 : i32
    %c0_i32_0 = arith.constant 0 : i32
    return %arg1, %c0_i32 : i32, i32
  }
  func.func @transform_4(%arg0: i32, %arg1: i32) -> (i32, i32) {
    %c0_i32 = arith.constant 0 : i32
    return %arg1, %arg0 : i32, i32
  }
}

</mosaic_0001>

<llo_original>
// kernel: wn_conv2d_relu.1
$region0: #{wn_conv2d_relu.1}
  #allocation0 [shape = 'u32[]', space=smem, size = 0x4, offset = 0x4, fixed_abs, tag = 'smem constant byte address 0x4 - core index']
  #allocation1 [shape = 'u32[144,128]{1,0:T(1,128)}', space=vmem, size = 0x12000, scoped, tag = 'internal scratch']
  %s0 = inlined_call_operand.vmem [shape: f32[64,128], index: 0, kind: input, shape index: {}]
  %s1 = inlined_call_operand.vmem [shape: f32[32,64], index: 1, kind: input, shape index: {}]
  %s2 = inlined_call_operand.vmem [shape: f32[32,1], index: 2, kind: input, shape index: {}]
  %s3 = inlined_call_operand.vmem [shape: f32[32,1], index: 3, kind: input, shape index: {}]
  %s4 = inlined_call_operand.vmem [shape: f32[32,128], index: 4, kind: output, shape index: {}]
  %s5 = sld [smem:[#allocation0]]
  $region26: #{wn_conv2d_relu.1} parent=0
    _
  %s7 = ssub.s32 1, %s5
  %s8 = scalar_select 0, %s7, %s5
  // Predicated region
  $region2: #{wn_conv2d_relu.1} parent=0 // pred_check
    _
  $region3: #{wn_conv2d_relu.1} parent=0 // pred_check_branch
    %10 = sbr.rel (0) target = $region5
  $region4: #{wn_conv2d_relu.1} parent=0 // pred_region
    _
  $region5: #{wn_conv2d_relu.1} parent=0 // pred_fallthru
    _
  // Predicated region
  $region6: #{wn_conv2d_relu.1} parent=0 // pred_check
    _
  $region7: #{wn_conv2d_relu.1} parent=0 // pred_check_branch
    %12 = sbr.rel (0) target = $region9
  $region8: #{wn_conv2d_relu.1} parent=0 // pred_region
    _
  $region9: #{wn_conv2d_relu.1} parent=0 // pred_fallthru
    _
  // Predicated region
  $region10: #{wn_conv2d_relu.1} parent=0 // pred_check
    _
  $region11: #{wn_conv2d_relu.1} parent=0 // pred_check_branch
    %14 = sbr.rel (0) target = $region13
  $region12: #{wn_conv2d_relu.1} parent=0 // pred_region
    _
  $region13: #{wn_conv2d_relu.1} parent=0 // pred_fallthru
    _
  // Predicated region
  $region14: #{wn_conv2d_relu.1} parent=0 // pred_check
    _
  $region15: #{wn_conv2d_relu.1} parent=0 // pred_check_branch
    %16 = sbr.rel (0) target = $region17
  $region16: #{wn_conv2d_relu.1} parent=0 // pred_region
    _
  $region17: #{wn_conv2d_relu.1} parent=0 // pred_fallthru
    _
  %v17 = vld [vmem:[%s1] sm:$0xff]
  %v18 = vld [vmem:[%s1 + $0x8] sm:$0xff]
  %v19 = vld [vmem:[%s1 + $0x10] sm:$0xff]
  %v20 = vld [vmem:[%s1 + $0x18] sm:$0xff]
  %v21 = vmul.f32 %v17, %v17
  %v22 = vmul.f32 %v18, %v18
  %v23 = vmul.f32 %v19, %v19
  %v24 = vmul.f32 %v20, %v20
  %vm25 = vcmask 523264
  %v26 = vsel %vm25, %v21, 0.0
  %27 = vadd.xlane.f32.xlu0 %v26
  %v28 = vpop.xlane.xlu0 %27
  %v29 = vsel %vm25, %v22, 0.0
  %30 = vadd.xlane.f32.xlu0 %v29
  %v31 = vpop.xlane.xlu0 %30
  %v32 = vsel %vm25, %v23, 0.0
  %33 = vadd.xlane.f32.xlu0 %v32
  %v34 = vpop.xlane.xlu0 %33
  %v35 = vsel %vm25, %v24, 0.0
  %36 = vadd.xlane.f32.xlu0 %v35
  %v37 = vpop.xlane.xlu0 %36
  %v38 = vrsqrt.pop %v28
  %v39 = vrsqrt.pop %v31
  %v40 = vrsqrt.pop %v34
  %v41 = vrsqrt.pop %v37
  %v42 = vld [vmem:[%s2] sm:$0xff]
  %v43 = vld [vmem:[%s2 + $0x8] sm:$0xff]
  %v44 = vld [vmem:[%s2 + $0x10] sm:$0xff]
  %v45 = vld [vmem:[%s2 + $0x18] sm:$0xff]
  %v46 = vmul.f32 %v42, %v38
  %v47 = vmul.f32 %v43, %v39
  %v48 = vmul.f32 %v44, %v40
  %v49 = vmul.f32 %v45, %v41
  %51 = vset.pattern.permute.xlu0 0
  %52 = vperm.xlu0 %51, %v46
  %v53 = vpop.permute.xlu0 %52
  %56 = vset.pattern.permute.xlu0 0
  %57 = vperm.xlu0 %56, %v47
  %v58 = vpop.permute.xlu0 %57
  %61 = vset.pattern.permute.xlu0 0
  %62 = vperm.xlu0 %61, %v48
  %v63 = vpop.permute.xlu0 %62
  %66 = vset.pattern.permute.xlu0 0
  %67 = vperm.xlu0 %66, %v49
  %v68 = vpop.permute.xlu0 %67
  %v70 = vmul.f32 %v17, %v53
  %v71 = vmul.f32 %v18, %v58
  %v72 = vmul.f32 %v19, %v63
  %v73 = vmul.f32 %v20, %v68
  %v74 = vld [vmem:[%s0] sm:$0xff]
  %v75 = vld [vmem:[%s0 + $0x8] sm:$0xff]
  %v76 = vld [vmem:[%s0 + $0x10] sm:$0xff]
  %v77 = vld [vmem:[%s0 + $0x18] sm:$0xff]
  %v78 = vld [vmem:[%s0 + $0x20] sm:$0xff]
  %v79 = vld [vmem:[%s0 + $0x28] sm:$0xff]
  %v80 = vld [vmem:[%s0 + $0x30] sm:$0xff]
  %v81 = vld [vmem:[%s0 + $0x38] sm:$0xff]
  %v82 = vld [vmem:[%s3] sm:$0xff]
  %v83 = vld [vmem:[%s3 + $0x8] sm:$0xff]
  %v84 = vld [vmem:[%s3 + $0x10] sm:$0xff]
  %v85 = vld [vmem:[%s3 + $0x18] sm:$0xff]
  %87 = vset.pattern.permute.xlu0 0
  %88 = vperm.xlu0 %87, %v82
  %v89 = vpop.permute.xlu0 %88
  %92 = vset.pattern.permute.xlu0 0
  %93 = vperm.xlu0 %92, %v83
  %v94 = vpop.permute.xlu0 %93
  %97 = vset.pattern.permute.xlu0 0
  %98 = vperm.xlu0 %97, %v84
  %v99 = vpop.permute.xlu0 %98
  %102 = vset.pattern.permute.xlu0 0
  %103 = vperm.xlu0 %102, %v85
  %v104 = vpop.permute.xlu0 %103
  %v107 = vsel %vm25, %v70, 0
  %v110 = vsel %vm25, %v71, 0
  %v113 = vsel %vm25, %v72, 0
  %v116 = vsel %vm25, %v73, 0
  %118 = vmatprep.subr.mxu0 0.0
  %119 = vmatpush1.msra.mxu0 %v74
  %120 = vmatprep.subr.mxu0 0.0
  %121 = vmatpush1.msra.mxu0 %v75
  %122 = vmatprep.subr.mxu0 0.0
  %123 = vmatpush1.msra.mxu0 %v76
  %124 = vmatprep.subr.mxu0 0.0
  %125 = vmatpush1.msra.mxu0 %v77
  %126 = vmatprep.subr.mxu0 0.0
  %127 = vmatpush1.msra.mxu0 %v78
  %128 = vmatprep.subr.mxu0 0.0
  %129 = vmatpush1.msra.mxu0 %v79
  %130 = vmatprep.subr.mxu0 0.0
  %131 = vmatpush1.msra.mxu0 %v80
  %132 = vmatprep.subr.mxu0 0.0
  %133 = vmatpush1.msra.mxu0 %v81
  %134 = vmatprep.subr.mxu0 0.0
  %135 = vmatpush1.msra.mxu0 0.0
  %136 = vmatprep.subr.mxu0 0.0
  %137 = vmatpush1.msra.mxu0 0.0
  %138 = vmatprep.subr.mxu0 0.0
  %139 = vmatpush1.msra.mxu0 0.0
  %140 = vmatprep.subr.mxu0 0.0
  %141 = vmatpush1.msra.mxu0 0.0
  %142 = vmatprep.subr.mxu0 0.0
  %143 = vmatpush1.msra.mxu0 0.0
  %144 = vmatprep.subr.mxu0 0.0
  %145 = vmatpush1.msra.mxu0 0.0
  %146 = vmatprep.subr.mxu0 0.0
  %147 = vmatpush1.msra.mxu0 0.0
  %148 = vmatprep.subr.mxu0 0.0
  %149 = vmatpush1.msra.mxu0 0.0
  %150 = vmatprep.subr.mxu0 0.0
  %151 = vmatpush1.msra.mxu0 0.0
  %152 = vmatprep.subr.mxu0 0.0
  %153 = vmatpush1.msra.mxu0 0.0
  %154 = vmatprep.subr.mxu0 0.0
  %155 = vmatpush1.msra.mxu0 0.0
  %156 = vmatprep.subr.mxu0 0.0
  %157 = vmatpush1.msra.mxu0 0.0
  %158 = vmatprep.subr.mxu0 0.0
  %159 = vmatpush1.msra.mxu0 0.0
  %160 = vmatprep.subr.mxu0 0.0
  %161 = vmatpush1.msra.mxu0 0.0
  %162 = vmatprep.subr.mxu0 0.0
  %163 = vmatpush1.msra.mxu0 0.0
  %164 = vmatprep.subr.mxu0 0.0
  %165 = vmatpush1.msra.mxu0 0.0
  %166 = vmatprep.subr.mxu0 0.0
  %167 = vmatpush1.msra.mxu0 0.0
  %168 = vmatprep.subr.mxu0 0.0
  %169 = vmatpush1.msra.mxu0 0.0
  %170 = vmatprep.subr.mxu0 0.0
  %171 = vmatpush1.msra.mxu0 0.0
  %172 = vmatprep.subr.mxu0 0.0
  %173 = vmatpush1.msra.mxu0 0.0
  %174 = vmatprep.subr.mxu0 0.0
  %175 = vmatpush1.msra.mxu0 0.0
  %176 = vmatprep.subr.mxu0 0.0
  %177 = vmatpush1.msra.mxu0 0.0
  %178 = vmatprep.subr.mxu0 0.0
  %179 = vmatpush1.msra.mxu0 0.0
  %180 = vmatprep.subr.mxu0 0.0
  %181 = vmatpush1.msra.mxu0 0.0
  %182 = vmatprep.mubr.f32.mxu0 0.0
  %183 = vmatmul.mubr.f32.gmra.mrb[0].mxu0 %v107
  %v184 = vpop.f32.mrb[0].mxu0
  %v185 = vadd.f32 %v89, %v184
  %v186 = vpop.f32.mrb[0].mxu0
  %187 = vmatprep.mubr.f32.mxu0 0.0
  %188 = vmatmul.mubr.f32.gmra.mrb[0].mxu0 %v110
  %v189 = vpop.f32.mrb[0].mxu0
  %v190 = vadd.f32 %v94, %v189
  %v191 = vpop.f32.mrb[0].mxu0
  %192 = vmatprep.mubr.f32.mxu0 0.0
  %193 = vmatmul.mubr.f32.gmra.mrb[0].mxu0 %v113
  %v194 = vpop.f32.mrb[0].mxu0
  %v195 = vadd.f32 %v99, %v194
  %v196 = vpop.f32.mrb[0].mxu0
  %197 = vmatprep.mubr.f32.mxu0 0.0
  %198 = vmatmul.mubr.f32.gmra.mrb[0].mxu0 %v116
  %v199 = vpop.f32.mrb[0].mxu0
  %v200 = vadd.f32 %v104, %v199
  %v201 = vpop.f32.mrb[0].mxu0
  %202 = vdwg.mxu0
  %v203 = vmax.f32 %v185, 0.0
  %v204 = vmax.f32 %v190, 0.0
  %v205 = vmax.f32 %v195, 0.0
  %v206 = vmax.f32 %v200, 0.0
  %207 = vst [vmem:[%s4] sm:$0xff] %v203
  %208 = vst [vmem:[%s4 + $0x8] sm:$0xff] %v204
  %209 = vst [vmem:[%s4 + $0x10] sm:$0xff] %v205
  %210 = vst [vmem:[%s4 + $0x18] sm:$0xff] %v206
  // Predicated region
  $region18: #{wn_conv2d_relu.1} parent=0 // pred_check
    _
  $region19: #{wn_conv2d_relu.1} parent=0 // pred_check_branch
    %212 = sbr.rel (0) target = $region21
  $region20: #{wn_conv2d_relu.1} parent=0 // pred_region
    _
  $region21: #{wn_conv2d_relu.1} parent=0 // pred_fallthru
    _
  // Predicated region
  $region22: #{wn_conv2d_relu.1} parent=0 // pred_check
    _
  $region23: #{wn_conv2d_relu.1} parent=0 // pred_check_branch
    %214 = sbr.rel (0) target = $region25
  $region24: #{wn_conv2d_relu.1} parent=0 // pred_region
    _
  $region25: #{wn_conv2d_relu.1} parent=0 // pred_fallthru
    _

</llo_original>
